<compile_context>
chip_gen: v5e
topology: v5e:2x2
jax: 0.10.0
libtpu: 0.0.40
codegen_flags: <defaults>
</compile_context>

<pallas_src>
from functools import partial

import jax
import jax.numpy as jnp
from jax.experimental import pallas as pl
from jax.experimental.pallas import tpu as pltpu


LANE = 128  # TPU lane width; padded feature dims are multiples of this.


def _round_up(n, m):
    return ((n + m - 1) // m) * m


def _discriminator_kernel(x_ref, w1_ref, b1_ref, w2_ref, b2_ref, o_ref):
    # ----- Layer 1: SNLinear(100 -> 50) on the MXU -------------------------
    # x streams in as f32 straight from HBM; cast to bf16 in-register for the
    # MXU (f32 accumulation).  w1 is a resident bf16 (in_f, 128) tile.
    xb = x_ref[...].astype(jnp.bfloat16)
    h = jnp.dot(xb, w1_ref[...], preferred_element_type=jnp.float32)
    h = h + b1_ref[...]                       # f32 bias add (VPU)
    h = jnp.maximum(h, 0.1 * h)               # LeakyReLU(0.1)

    # ----- Layer 2: SNLinear(50 -> 1) as VPU multiply + lane reduce --------
    # w2_ref is a zero-padded (1, 128) f32 row; padded lanes contribute 0.
    o = jnp.sum(h * w2_ref[...], axis=-1, keepdims=True) + b2_ref[0, 0]
    o = jnp.maximum(o, 0.1 * o)               # LeakyReLU(0.1)

    # Narrow (tile_b, 1) store: 4 bytes per batch row of output HBM traffic.
    o_ref[...] = o


@partial(jax.jit, static_argnames=("tile_b",))
def discriminator_forward(x, w1_sn, b1, w2_sn, b2, tile_b=1024):
    """Forward pass of Discriminator.

    x:     (B, 100) f32
    w1_sn: (50, 100) f32  spectral-normalized weight of SNLinear(100, 50)
    b1:    (50,)     f32
    w2_sn: (1, 50)   f32  spectral-normalized weight of SNLinear(50, 1)
    b2:    (1,)      f32
    returns (B, 1) f32
    """
    B, in_f = x.shape
    hid = w1_sn.shape[0]
    hid_pad = max(LANE, pl.cdiv(hid, LANE) * LANE)    # 50 -> 128

    # Big batch tiles amortize per-step overhead; clamp so small batches get a
    # single exactly-fitting block (no boundary padding needed in the demo).
    tile_b_eff = max(8, min(tile_b, _round_up(B, 8)))
    num_tiles = pl.cdiv(B, tile_b_eff)
    b_pad = num_tiles * tile_b_eff

    # ---- tiny resident parameter tiles (weights total ~100 KiB) -----------
    w1_p = jnp.zeros((in_f, hid_pad), jnp.bfloat16).at[:, :hid].set(
        w1_sn.T.astype(jnp.bfloat16))
    b1_p = jnp.zeros((1, hid_pad), jnp.float32).at[0, :hid].set(
        b1.astype(jnp.float32))
    w2_p = jnp.zeros((1, hid_pad), jnp.float32).at[0, :hid].set(
        w2_sn.reshape(-1).astype(jnp.float32))
    b2_p = jnp.asarray(b2, jnp.float32).reshape(1, 1)

    out = pl.pallas_call(
        _discriminator_kernel,
        out_shape=jax.ShapeDtypeStruct((b_pad, 1), jnp.float32),
        grid=(num_tiles,),
        in_specs=[
            # x is read directly (no padded/bf16 copy): last block dim == in_f.
            pl.BlockSpec((tile_b_eff, in_f), lambda i: (i, 0)),
            pl.BlockSpec((in_f, hid_pad), lambda i: (0, 0)),   # w1 (resident)
            pl.BlockSpec((1, hid_pad), lambda i: (0, 0)),      # b1 (resident)
            pl.BlockSpec((1, hid_pad), lambda i: (0, 0)),      # w2 row
            pl.BlockSpec(memory_space=pltpu.MemorySpace.SMEM),  # b2 scalar
        ],
        out_specs=pl.BlockSpec((tile_b_eff, 1), lambda i: (i, 0)),
        compiler_params=pltpu.CompilerParams(
            dimension_semantics=("parallel",)),
    )(x.astype(jnp.float32), w1_p, b1_p, w2_p, b2_p)

    return out[:B]


# ---------------- parameter setup (plain-JAX glue) ----------------

def _linear_init(key, out_features, in_features):
    """PyTorch nn.Linear default init: U(-1/sqrt(fan_in), 1/sqrt(fan_in))."""
    kw, kb = jax.random.split(key)
    bound = 1.0 / jnp.sqrt(jnp.float32(in_features))
    w = jax.random.uniform(kw, (out_features, in_features), jnp.float32, -bound, bound)
    b = jax.random.uniform(kb, (out_features,), jnp.float32, -bound, bound)
    return w, b


def _spectral_norm(w, key, n_power_iterations=1, eps=1e-12):
    """Spectral-normalize w (out, in) like torch spectral_norm defaults.

    # TODO(synk): torch keeps a persistent `u` buffer refined across training
    # steps; here a fresh `u` is drawn per call, so sigma differs slightly from
    # a long-trained PyTorch model. The kernel consumes whatever normalized
    # weights it is handed, so this only affects the glue.
    """
    u = jax.random.normal(key, (w.shape[0],), jnp.float32)
    u = u / jnp.maximum(jnp.linalg.norm(u), eps)
    v = jnp.zeros((w.shape[1],), jnp.float32)
    for _ in range(n_power_iterations):
        v = w.T @ u
        v = v / jnp.maximum(jnp.linalg.norm(v), eps)
        u = w @ v
        u = u / jnp.maximum(jnp.linalg.norm(u), eps)
    sigma = u @ (w @ v)
    return w / sigma


if __name__ == "__main__":
    key = jax.random.PRNGKey(0)
    k_x, k_l1, k_l2, k_u1, k_u2 = jax.random.split(key, 5)

    B, IN, HID, OUT = 8, 100, 50, 1

    # Deterministic synthetic parameters (shapes from Discriminator.__init__).
    w1, b1 = _linear_init(k_l1, HID, IN)     # (50, 100), (50,)
    w2, b2 = _linear_init(k_l2, OUT, HID)    # (1, 50),  (1,)
    w1_sn = _spectral_norm(w1, k_u1)
    w2_sn = _spectral_norm(w2, k_u2)

    x = jax.random.normal(k_x, (B, IN), jnp.float32)     # (8, 100)

    out = discriminator_forward(x, w1_sn, b1, w2_sn, b2)
    out = jax.block_until_ready(out)

    # Pure-JAX reference of the same forward, mirroring the bf16 matmul-input
    # cast used for layer 1 (accumulation stays f32).  Layer 2 is done as an
    # explicit f32 multiply+sum so it has no matmul-precision ambiguity.
    def leaky(v):
        return jnp.where(v > 0, v, 0.1 * v)

    x_bf = x.astype(jnp.bfloat16).astype(jnp.float32)
    w1_bf = w1_sn.T.astype(jnp.bfloat16).astype(jnp.float32)
    h_ref = leaky(x_bf @ w1_bf + b1[None, :])
    ref = leaky(jnp.sum(h_ref * w2_sn.reshape(1, -1), axis=-1, keepdims=True)
                + b2[None, :])

    assert out.shape == (B, OUT), out.shape
    assert jnp.allclose(out, ref, atol=1e-4, rtol=1e-4), (
        float(jnp.max(jnp.abs(out - ref))))

    print("KERNEL_OK")
</pallas_src>

<mosaic_0001>
module attributes {stable_mosaic.version = 11 : i64} {
  func.func @_discriminator_kernel(%arg0: i32, %arg1: memref<8x100xf32, #tpu.memory_space<vmem>>, %arg2: memref<100x128xbf16, #tpu.memory_space<vmem>>, %arg3: memref<1x128xf32, #tpu.memory_space<vmem>>, %arg4: memref<1x128xf32, #tpu.memory_space<vmem>>, %arg5: memref<1x1xf32, #tpu.memory_space<smem>>, %arg6: memref<8x1xf32, #tpu.memory_space<vmem>>) attributes {dimension_semantics = [#tpu.dimension_semantics<parallel>], iteration_bounds = array<i64: 1>, scalar_prefetch = 0 : i64, scratch_operands = 0 : i64, tpu.core_type = #tpu.core_type<tc>, window_params = [{transform_indices = @transform_0, window_bounds = array<i64: 8, 100>}, {pipeline_mode = #tpu.pipeline_mode<synchronous>, transform_indices = @transform_1, window_bounds = array<i64: 100, 128>}, {pipeline_mode = #tpu.pipeline_mode<synchronous>, transform_indices = @transform_2, window_bounds = array<i64: 1, 128>}, {pipeline_mode = #tpu.pipeline_mode<synchronous>, transform_indices = @transform_3, window_bounds = array<i64: 1, 128>}, {transform_indices = @transform_4, window_bounds = array<i64: 1, 1>}, {transform_indices = @transform_5, window_bounds = array<i64: 8, 1>}]} {
    %c0 = arith.constant 0 : index
    %c0_0 = arith.constant 0 : index
    %0 = vector.load %arg1[%c0, %c0_0] : memref<8x100xf32, #tpu.memory_space<vmem>>, vector<8x100xf32>
    %1 = arith.truncf %0 : vector<8x100xf32> to vector<8x100xbf16>
    %c0_1 = arith.constant 0 : index
    %c0_2 = arith.constant 0 : index
    %2 = vector.load %arg2[%c0_1, %c0_2] : memref<100x128xbf16, #tpu.memory_space<vmem>>, vector<100x128xbf16>
    %cst = arith.constant dense<0.000000e+00> : vector<8x128xf32>
    %3 = tpu.matmul %1, %2, %cst {dimension_numbers = #tpu.dot_dimension_numbers<[1], [0], [0], [1], [0, 0, 1, 1], [], []>} : vector<8x100xbf16>, vector<100x128xbf16>, vector<8x128xf32> -> vector<8x128xf32>
    %c0_3 = arith.constant 0 : index
    %c0_4 = arith.constant 0 : index
    %4 = vector.load %arg3[%c0_3, %c0_4] : memref<1x128xf32, #tpu.memory_space<vmem>>, vector<1x128xf32>
    %5 = vector.broadcast %4 : vector<1x128xf32> to vector<8x128xf32>
    %6 = arith.addf %3, %5 : vector<8x128xf32>
    %cst_5 = arith.constant 1.000000e-01 : f32
    %7 = vector.broadcast %cst_5 : f32 to vector<8x128xf32>
    %8 = arith.mulf %7, %6 : vector<8x128xf32>
    %9 = arith.maximumf %6, %8 : vector<8x128xf32>
    %c0_6 = arith.constant 0 : index
    %c0_7 = arith.constant 0 : index
    %10 = vector.load %arg4[%c0_6, %c0_7] : memref<1x128xf32, #tpu.memory_space<vmem>>, vector<1x128xf32>
    %11 = vector.broadcast %10 : vector<1x128xf32> to vector<8x128xf32>
    %12 = arith.mulf %9, %11 : vector<8x128xf32>
    %cst_8 = arith.constant dense<0.000000e+00> : vector<8xf32>
    %13 = vector.multi_reduction <add>, %12, %cst_8 [1] : vector<8x128xf32> to vector<8xf32>
    %14 = vector.shape_cast %13 : vector<8xf32> to vector<8x1xf32>
    %c0_9 = arith.constant 0 : index
    %c0_10 = arith.constant 0 : index
    %15 = memref.load %arg5[%c0_9, %c0_10] : memref<1x1xf32, #tpu.memory_space<smem>>
    %16 = vector.broadcast %15 : f32 to vector<8x1xf32>
    %17 = arith.addf %14, %16 : vector<8x1xf32>
    %cst_11 = arith.constant 1.000000e-01 : f32
    %18 = vector.broadcast %cst_11 : f32 to vector<8x1xf32>
    %19 = arith.mulf %18, %17 : vector<8x1xf32>
    %20 = arith.maximumf %17, %19 : vector<8x1xf32>
    %c0_12 = arith.constant 0 : index
    %c0_13 = arith.constant 0 : index
    %21 = vector.load %arg6[%c0_12, %c0_13] : memref<8x1xf32, #tpu.memory_space<vmem>>, vector<8x1xf32>
    tpu.vector_store %arg6[%c0_12, %c0_13], %20 {strides = array<i32>} : memref<8x1xf32, #tpu.memory_space<vmem>>, vector<8x1xf32>,
    return
  }
  func.func @transform_0(%arg0: i32) -> (i32, i32) {
    %c0_i32 = arith.constant 0 : i32
    %c0_i32_0 = arith.constant 0 : i32
    return %arg0, %c0_i32 : i32, i32
  }
  func.func @transform_1(%arg0: i32) -> (i32, i32) {
    %c0_i32 = arith.constant 0 : i32
    %c0_i32_0 = arith.constant 0 : i32
    %c0_i32_1 = arith.constant 0 : i32
    return %c0_i32, %c0_i32_0 : i32, i32
  }
  func.func @transform_2(%arg0: i32) -> (i32, i32) {
    %c0_i32 = arith.constant 0 : i32
    %c0_i32_0 = arith.constant 0 : i32
    %c0_i32_1 = arith.constant 0 : i32
    return %c0_i32, %c0_i32_0 : i32, i32
  }
  func.func @transform_3(%arg0: i32) -> (i32, i32) {
    %c0_i32 = arith.constant 0 : i32
    %c0_i32_0 = arith.constant 0 : i32
    %c0_i32_1 = arith.constant 0 : i32
    return %c0_i32, %c0_i32_0 : i32, i32
  }
  func.func @transform_4(%arg0: i32) -> (i32, i32) {
    %c0_i32 = arith.constant 0 : i32
    %c0_i32_0 = arith.constant 0 : i32
    %c0_i32_1 = arith.constant 0 : i32
    return %c0_i32, %c0_i32_0 : i32, i32
  }
  func.func @transform_5(%arg0: i32) -> (i32, i32) {
    %c0_i32 = arith.constant 0 : i32
    %c0_i32_0 = arith.constant 0 : i32
    return %arg0, %c0_i32 : i32, i32
  }
}

</mosaic_0001>

<llo_original>
// kernel: discriminator_forward.1
$region0: #{discriminator_forward.1}
  #allocation0 [shape = 'u32[]', space=smem, size = 0x4, offset = 0x4, fixed_abs, tag = 'smem constant byte address 0x4 - core index']
  #allocation1 [shape = 'u32[72,128]{1,0:T(1,128)}', space=vmem, size = 0x9000, scoped, tag = 'internal scratch']
  #allocation2 [shape = 'f32[1,1]{1,0:T(1,128)S(6)}', space=smem, size = 0x200, scoped, tag = 'scoped memory for discriminator_forward.1']
  %s0 = inlined_call_operand.vmem [shape: f32[8,100], index: 0, kind: input, shape index: {}]
  %s1 = inlined_call_operand.vmem [shape: bf16[100,128], index: 1, kind: input, shape index: {}]
  %s2 = inlined_call_operand.vmem [shape: f32[1,128], index: 2, kind: input, shape index: {}]
  %s3 = inlined_call_operand.vmem [shape: f32[1,128], index: 3, kind: input, shape index: {}]
  %s4 = inlined_call_operand.<no memory space> [shape: f32[1,1], index: 4, kind: input, shape index: {}]
  %s5 = inlined_call_operand.vmem [shape: f32[8,1], index: 5, kind: output, shape index: {}]
  %s6 = sld [smem:[#allocation0]]
  $region30: #{discriminator_forward.1} parent=0
    _
  %s8 = ssub.s32 1, %s6
  %s9 = scalar_select 0, %s8, %s6
  %10 = sst [smem:[#allocation2]] %s4
  // Predicated region
  $region2: #{discriminator_forward.1} parent=0 // pred_check
    _
  $region3: #{discriminator_forward.1} parent=0 // pred_check_branch
    %12 = sbr.rel (0) target = $region5
  $region4: #{discriminator_forward.1} parent=0 // pred_region
    _
  $region5: #{discriminator_forward.1} parent=0 // pred_fallthru
    _
  // Predicated region
  $region6: #{discriminator_forward.1} parent=0 // pred_check
    _
  $region7: #{discriminator_forward.1} parent=0 // pred_check_branch
    %14 = sbr.rel (0) target = $region9
  $region8: #{discriminator_forward.1} parent=0 // pred_region
    _
  $region9: #{discriminator_forward.1} parent=0 // pred_fallthru
    _
  // Predicated region
  $region10: #{discriminator_forward.1} parent=0 // pred_check
    _
  $region11: #{discriminator_forward.1} parent=0 // pred_check_branch
    %16 = sbr.rel (0) target = $region13
  $region12: #{discriminator_forward.1} parent=0 // pred_region
    _
  $region13: #{discriminator_forward.1} parent=0 // pred_fallthru
    _
  // Predicated region
  $region14: #{discriminator_forward.1} parent=0 // pred_check
    _
  $region15: #{discriminator_forward.1} parent=0 // pred_check_branch
    %18 = sbr.rel (0) target = $region17
  $region16: #{discriminator_forward.1} parent=0 // pred_region
    _
  $region17: #{discriminator_forward.1} parent=0 // pred_fallthru
    _
  // Predicated region
  $region18: #{discriminator_forward.1} parent=0 // pred_check
    _
  $region19: #{discriminator_forward.1} parent=0 // pred_check_branch
    %20 = sbr.rel (0) target = $region21
  $region20: #{discriminator_forward.1} parent=0 // pred_region
    _
  $region21: #{discriminator_forward.1} parent=0 // pred_fallthru
    _
  %v22 = vld [vmem:[%s0] sm:$0xff]
  %v23 = vpack.c.bf16 %v22, %v22
  %v24 = vld [vmem:[%s1] sm:$0xf]
  %v25 = vld [vmem:[%s1 + $0x4] sm:$0xf]
  %v26 = vld [vmem:[%s1 + $0x8] sm:$0xf]
  %v27 = vld [vmem:[%s1 + $0xc] sm:$0xf]
  %v28 = vld [vmem:[%s1 + $0x10] sm:$0xf]
  %v29 = vld [vmem:[%s1 + $0x14] sm:$0xf]
  %v30 = vld [vmem:[%s1 + $0x18] sm:$0xf]
  %v31 = vld [vmem:[%s1 + $0x1c] sm:$0xf]
  %v32 = vld [vmem:[%s1 + $0x20] sm:$0xf]
  %v33 = vld [vmem:[%s1 + $0x24] sm:$0xf]
  %v34 = vld [vmem:[%s1 + $0x28] sm:$0xf]
  %v35 = vld [vmem:[%s1 + $0x2c] sm:$0xf]
  %v36 = vld [vmem:[%s1 + $0x30] sm:$0x3]
  %v37 = vld [vmem:[%s2] sm:$0x1]
  %v39 = vperm.slane %v37, 0
  %v54 = vunpack.c.l.b16 %v24
  %v55 = vunpack.c.l.b16 %v25
  %v56 = vunpack.c.l.b16 %v26
  %v57 = vunpack.c.l.b16 %v27
  %v58 = vunpack.c.l.b16 %v28
  %v59 = vunpack.c.l.b16 %v29
  %v60 = vunpack.c.l.b16 %v30
  %v61 = vunpack.c.l.b16 %v31
  %v62 = vunpack.c.l.b16 %v32
  %v63 = vunpack.c.l.b16 %v33
  %v64 = vunpack.c.l.b16 %v34
  %v65 = vunpack.c.l.b16 %v35
  %v66 = vunpack.c.l.b16 %v36
  %v67 = vpack.c.b16 %v55, %v54
  %v68 = vpack.c.b16 %v57, %v56
  %v69 = vpack.c.b16 %v59, %v58
  %v70 = vpack.c.b16 %v61, %v60
  %v71 = vpack.c.b16 %v63, %v62
  %v72 = vpack.c.b16 %v65, %v64
  %v73 = vpack.c.b16 %v66, %v66
  %vm80 = vcmask 818176
  %v82 = vsel %vm80, %v23, 0
  %vm84 = vcmask 1041408
  %v86 = vsel %vm84, %v73, 0
  %88 = vmatpush.bf16.msra.mxu0 0
  %89 = vmatpush.bf16.msra.mxu0 %v86
  %90 = vmatpush.bf16.msra.mxu0 %v72
  %91 = vmatpush.bf16.msra.mxu0 %v71
  %92 = vmatpush.bf16.msra.mxu0 %v70
  %93 = vmatpush.bf16.msra.mxu0 %v69
  %94 = vmatpush.bf16.msra.mxu0 %v68
  %95 = vmatpush.bf16.msra.mxu0 %v67
  %96 = vmatmul.bf16.gmra.mxu0 %v82
  %v97 = vpop.f32.mrf.mxu0
  %v98 = vadd.f32 %v39, %v97
  %v99 = vpop.f32.mrf.mxu0
  %100 = vdwg.mxu0
  %v101 = vmul.f32 %v98, 0.1
  %v102 = vmax.f32 %v98, %v101
  %v103 = vld [vmem:[%s3] sm:$0x1]
  %v105 = vperm.slane %v103, 0
  %v107 = vmul.f32 %v102, %v105
  %108 = vadd.xlane.f32.xlu0 %v107
  %v109 = vpop.xlane.xlu0 %108
  %s110 = sld [smem:[#allocation2]]
  %v111 = vstv %s110
  %v112 = vadd.f32 %v109, %v111
  %v113 = vmul.f32 %v112, 0.1
  %v114 = vmax.f32 %v112, %v113
  %vm115 = vcmask 7168
  %116 = vst.msk [vmem:[%s5] sm:$0xff] %vm115, %v114
  // Predicated region
  $region22: #{discriminator_forward.1} parent=0 // pred_check
    _
  $region23: #{discriminator_forward.1} parent=0 // pred_check_branch
    %118 = sbr.rel (0) target = $region25
  $region24: #{discriminator_forward.1} parent=0 // pred_region
    _
  $region25: #{discriminator_forward.1} parent=0 // pred_fallthru
    _
  // Predicated region
  $region26: #{discriminator_forward.1} parent=0 // pred_check
    _
  $region27: #{discriminator_forward.1} parent=0 // pred_check_branch
    %120 = sbr.rel (0) target = $region29
  $region28: #{discriminator_forward.1} parent=0 // pred_region
    _
  $region29: #{discriminator_forward.1} parent=0 // pred_fallthru
    _

</llo_original>
